<compile_context>
chip_gen: v7x
topology: tpu7x:2x2x1
jax: 0.10.0
libtpu: 0.0.40
codegen_flags: <defaults>
</compile_context>

<pallas_src>
import math

import jax
import jax.numpy as jnp
from jax import lax
from jax.experimental import pallas as pl
from jax.experimental.pallas import tpu as pltpu

NEG_INF = -1e30  # large finite negative: exp() underflows to 0, never NaN


def head_kernel(x_ref, w_qkv_ref, o_ref):
    # x_ref: (B, T, C) f32; w_qkv_ref: (C, 3H) bf16 (q cols pre-scaled by
    # C**-0.5); o_ref: (B, T, H) f32.
    B, T, C = x_ref.shape
    H = w_qkv_ref.shape[1] // 3

    # Fused QKV projection over the whole batch: (B*T, C) @ (C, 3H).
    # bf16 MXU inputs, f32 accumulation.
    x2d = x_ref[...].reshape(B * T, C).astype(jnp.bfloat16)
    w = w_qkv_ref[...]                                            # bf16
    qkv = jnp.dot(x2d, w, preferred_element_type=jnp.float32)     # (B*T, 3H) f32
    qkv = qkv.reshape(B, T, 3 * H)

    q = qkv[..., 0 * H:1 * H].astype(jnp.bfloat16)   # scale already folded in
    k = qkv[..., 1 * H:2 * H].astype(jnp.bfloat16)
    v = qkv[..., 2 * H:3 * H].astype(jnp.bfloat16)

    # Batched scores: contract the head dim of q and k (no explicit k.T).
    scores = jnp.einsum('btd,bsd->bts', q, k,
                        preferred_element_type=jnp.float32)       # (B, T, T) f32

    # Causal mask regenerated in-kernel (cheaper than a DMA'd input at T=8).
    row = lax.broadcasted_iota(jnp.int32, (T, T), 0)
    col = lax.broadcasted_iota(jnp.int32, (T, T), 1)
    scores = jnp.where((col <= row)[None, :, :], scores, NEG_INF)

    # Numerically-stable softmax, all f32 elementwise (v5e-safe).
    m = jnp.max(scores, axis=-1, keepdims=True)
    p = jnp.exp(scores - m)                           # (B, T, T) unnormalized
    s = jnp.sum(p, axis=-1, keepdims=True)            # (B, T, 1)

    # Output: bf16 MXU inputs, f32 accumulation; exact f32 normalization.
    out = jnp.einsum('bts,bsd->btd', p.astype(jnp.bfloat16), v,
                     preferred_element_type=jnp.float32)          # (B, T, H)
    o_ref[...] = (out / s).astype(o_ref.dtype)


def fuse_head_params(wk, wq, wv, n_embd):
    """One-time (init) weight fusion: (C, 3H) bf16, q columns pre-scaled.

    NOTE: scaling by n_embd**-0.5 (embedding dim) intentionally mirrors
    bigram.py, not the usual head_size**-0.5.
    """
    scale = n_embd ** -0.5
    w_qkv = jnp.concatenate([wq * scale, wk, wv], axis=1)
    return w_qkv.astype(jnp.bfloat16)


def attention_head(x, w_qkv):
    """x: (B, T, C) f32; w_qkv: (C, 3H) bf16 (from fuse_head_params) -> (B, T, H) f32."""
    B, T, C = x.shape
    H = w_qkv.shape[1] // 3

    return pl.pallas_call(
        head_kernel,
        out_shape=jax.ShapeDtypeStruct((B, T, H), x.dtype),
        grid_spec=pltpu.PrefetchScalarGridSpec(
            num_scalar_prefetch=0,
            grid=(1,),  # single step: whole batch per invocation
            in_specs=[
                pl.BlockSpec((B, T, C), lambda i: (0, 0, 0)),
                pl.BlockSpec((C, 3 * H), lambda i: (0, 0)),
            ],
            out_specs=pl.BlockSpec((B, T, H), lambda i: (0, 0, 0)),
        ),
        compiler_params=pltpu.CompilerParams(
            dimension_semantics=("arbitrary",),
        ),
    )(x, w_qkv)


def reference_head(x, wk, wq, wv):
    """Pure-JAX f32 reference mirroring the PyTorch forward (eval mode)."""
    B, T, C = x.shape
    k = x @ wk
    q = x @ wq
    v = x @ wv
    wei = (q @ jnp.swapaxes(k, -2, -1)) * (C ** -0.5)
    tril = jnp.tril(jnp.ones((T, T), dtype=bool))
    wei = jnp.where(tril, wei, -jnp.inf)
    wei = jax.nn.softmax(wei, axis=-1)
    return wei @ v


if __name__ == "__main__":
    # Small shapes consistent with the module: batch=2, seq=8, n_embd=32, head_size=16
    B, T, C, H = 2, 8, 32, 16

    key = jax.random.PRNGKey(0)
    kx, kk, kq, kv = jax.random.split(key, 4)

    x = jax.random.normal(kx, (B, T, C), dtype=jnp.float32)
    # Deterministic init analogous to nn.Linear default (uniform in +-1/sqrt(C)),
    # stored transposed as (C, H) for x @ W.
    bound = 1.0 / math.sqrt(C)
    wk = jax.random.uniform(kk, (C, H), jnp.float32, -bound, bound)
    wq = jax.random.uniform(kq, (C, H), jnp.float32, -bound, bound)
    wv = jax.random.uniform(kv, (C, H), jnp.float32, -bound, bound)

    # One-time parameter fusion (init-time, not a per-call wrapper op).
    w_qkv = fuse_head_params(wk, wq, wv, n_embd=C)

    out = attention_head(x, w_qkv)
    out = jax.block_until_ready(out)

    ref = reference_head(x, wk, wq, wv)
    assert out.shape == (B, T, H)
    # Tolerance accounts for bf16 MXU operands (weights + activations) vs the
    # pure-f32 reference; the softmax itself is exact f32.
    assert jnp.allclose(out, ref, atol=3e-2, rtol=3e-2), (
        float(jnp.max(jnp.abs(out - ref)))
    )

    print("KERNEL_OK")
</pallas_src>

<mosaic_0001>
module attributes {stable_mosaic.version = 11 : i64} {
  func.func @head_kernel(%arg0: i32, %arg1: memref<2x8x32xf32, #tpu.memory_space<vmem>>, %arg2: memref<32x48xbf16, #tpu.memory_space<vmem>>, %arg3: memref<2x8x16xf32, #tpu.memory_space<vmem>>) attributes {dimension_semantics = [#tpu.dimension_semantics<arbitrary>], iteration_bounds = array<i64: 1>, scalar_prefetch = 0 : i64, scratch_operands = 0 : i64, tpu.core_type = #tpu.core_type<tc>, window_params = [{pipeline_mode = #tpu.pipeline_mode<synchronous>, transform_indices = @transform_0, window_bounds = array<i64: 2, 8, 32>}, {pipeline_mode = #tpu.pipeline_mode<synchronous>, transform_indices = @transform_1, window_bounds = array<i64: 32, 48>}, {pipeline_mode = #tpu.pipeline_mode<synchronous>, transform_indices = @transform_2, window_bounds = array<i64: 2, 8, 16>}]} {
    %c0 = arith.constant 0 : index
    %c0_0 = arith.constant 0 : index
    %c0_1 = arith.constant 0 : index
    %0 = vector.load %arg1[%c0, %c0_0, %c0_1] : memref<2x8x32xf32, #tpu.memory_space<vmem>>, vector<2x8x32xf32>
    %1 = vector.shape_cast %0 : vector<2x8x32xf32> to vector<16x32xf32>
    %2 = arith.truncf %1 : vector<16x32xf32> to vector<16x32xbf16>
    %c0_2 = arith.constant 0 : index
    %c0_3 = arith.constant 0 : index
    %3 = vector.load %arg2[%c0_2, %c0_3] : memref<32x48xbf16, #tpu.memory_space<vmem>>, vector<32x48xbf16>
    %cst = arith.constant dense<0.000000e+00> : vector<16x48xf32>
    %4 = tpu.matmul %2, %3, %cst {dimension_numbers = #tpu.dot_dimension_numbers<[1], [0], [0], [1], [0, 0, 1, 1], [], []>} : vector<16x32xbf16>, vector<32x48xbf16>, vector<16x48xf32> -> vector<16x48xf32>
    %5 = vector.shape_cast %4 : vector<16x48xf32> to vector<2x8x48xf32>
    %6 = vector.extract_strided_slice %5 {offsets = [0, 0, 0], sizes = [2, 8, 16], strides = [1, 1, 1]} : vector<2x8x48xf32> to vector<2x8x16xf32>
    %7 = arith.truncf %6 : vector<2x8x16xf32> to vector<2x8x16xbf16>
    %8 = vector.extract_strided_slice %5 {offsets = [0, 0, 16], sizes = [2, 8, 16], strides = [1, 1, 1]} : vector<2x8x48xf32> to vector<2x8x16xf32>
    %9 = arith.truncf %8 : vector<2x8x16xf32> to vector<2x8x16xbf16>
    %10 = vector.extract_strided_slice %5 {offsets = [0, 0, 32], sizes = [2, 8, 16], strides = [1, 1, 1]} : vector<2x8x48xf32> to vector<2x8x16xf32>
    %11 = arith.truncf %10 : vector<2x8x16xf32> to vector<2x8x16xbf16>
    "tpu.trace_start"() <{level = 10 : i32, message = "btd,bsd->bts"}> : () -> ()
    %cst_4 = arith.constant dense<0.000000e+00> : vector<2x8x8xf32>
    %12 = tpu.matmul %7, %9, %cst_4 {dimension_numbers = #tpu.dot_dimension_numbers<[2], [2], [1], [1], [0, 0, 0, 1, 1, 1], [0], [0]>} : vector<2x8x16xbf16>, vector<2x8x16xbf16>, vector<2x8x8xf32> -> vector<2x8x8xf32>
    "tpu.trace_stop"() : () -> ()
    %13 = tpu.iota {dimensions = array<i32: 0>} : vector<8x8xi32>
    %14 = tpu.iota {dimensions = array<i32: 1>} : vector<8x8xi32>
    %15 = arith.cmpi sle, %14, %13 : vector<8x8xi32>
    %16 = vector.shape_cast %15 : vector<8x8xi1> to vector<1x8x8xi1>
    %cst_5 = arith.constant -1.000000e+30 : f32
    %17 = vector.shape_cast %16 : vector<1x8x8xi1> to vector<1x8x8xi1>
    %18 = vector.broadcast %17 : vector<1x8x8xi1> to vector<2x8x8xi1>
    %19 = vector.broadcast %cst_5 : f32 to vector<2x8x8xf32>
    %20 = arith.select %18, %12, %19 : vector<2x8x8xi1>, vector<2x8x8xf32>
    %cst_6 = arith.constant dense<0xFF800000> : vector<2x8xf32>
    %21 = vector.multi_reduction <maximumf>, %20, %cst_6 [2] : vector<2x8x8xf32> to vector<2x8xf32>
    %22 = vector.shape_cast %21 : vector<2x8xf32> to vector<2x8x1xf32>
    %23 = vector.broadcast %22 : vector<2x8x1xf32> to vector<2x8x8xf32>
    %24 = arith.subf %20, %23 : vector<2x8x8xf32>
    %25 = math.exp %24 : vector<2x8x8xf32>
    %cst_7 = arith.constant dense<0.000000e+00> : vector<2x8xf32>
    %26 = vector.multi_reduction <add>, %25, %cst_7 [2] : vector<2x8x8xf32> to vector<2x8xf32>
    %27 = vector.shape_cast %26 : vector<2x8xf32> to vector<2x8x1xf32>
    %28 = arith.truncf %25 : vector<2x8x8xf32> to vector<2x8x8xbf16>
    "tpu.trace_start"() <{level = 10 : i32, message = "bts,bsd->btd"}> : () -> ()
    %cst_8 = arith.constant dense<0.000000e+00> : vector<2x8x16xf32>
    %29 = tpu.matmul %28, %11, %cst_8 {dimension_numbers = #tpu.dot_dimension_numbers<[2], [1], [1], [2], [0, 0, 0, 1, 1, 2], [0], [0]>} : vector<2x8x8xbf16>, vector<2x8x16xbf16>, vector<2x8x16xf32> -> vector<2x8x16xf32>
    "tpu.trace_stop"() : () -> ()
    %30 = vector.broadcast %27 : vector<2x8x1xf32> to vector<2x8x16xf32>
    %31 = arith.divf %29, %30 : vector<2x8x16xf32>
    %c0_9 = arith.constant 0 : index
    %c0_10 = arith.constant 0 : index
    %c0_11 = arith.constant 0 : index
    %32 = vector.load %arg3[%c0_9, %c0_10, %c0_11] : memref<2x8x16xf32, #tpu.memory_space<vmem>>, vector<2x8x16xf32>
    tpu.vector_store %arg3[%c0_9, %c0_10, %c0_11], %31 {strides = array<i32>} : memref<2x8x16xf32, #tpu.memory_space<vmem>>, vector<2x8x16xf32>,
    return
  }
  func.func @transform_0(%arg0: i32) -> (i32, i32, i32) {
    %c0_i32 = arith.constant 0 : i32
    %c0_i32_0 = arith.constant 0 : i32
    %c0_i32_1 = arith.constant 0 : i32
    %c0_i32_2 = arith.constant 0 : i32
    return %c0_i32, %c0_i32_0, %c0_i32_1 : i32, i32, i32
  }
  func.func @transform_1(%arg0: i32) -> (i32, i32) {
    %c0_i32 = arith.constant 0 : i32
    %c0_i32_0 = arith.constant 0 : i32
    %c0_i32_1 = arith.constant 0 : i32
    return %c0_i32, %c0_i32_0 : i32, i32
  }
  func.func @transform_2(%arg0: i32) -> (i32, i32, i32) {
    %c0_i32 = arith.constant 0 : i32
    %c0_i32_0 = arith.constant 0 : i32
    %c0_i32_1 = arith.constant 0 : i32
    %c0_i32_2 = arith.constant 0 : i32
    return %c0_i32, %c0_i32_0, %c0_i32_1 : i32, i32, i32
  }
}

</mosaic_0001>

<llo_original>
// kernel: tpu_custom_call.1
$region0: #{tpu_custom_call.1}
  #allocation0 [shape = 'u32[]', space=smem, size = 0x4, offset = 0x4, fixed_abs, tag = 'smem constant byte address 0x4 - core index']
  #allocation1 [shape = 'u32[144,128]{1,0:T(1,128)}', space=vmem, size = 0x12000, scoped, tag = 'internal scratch']
  %s0 = inlined_call_operand.hbm [shape: f32[2,8,32], index: 0, kind: input, shape index: {}]
  %s1 = inlined_call_operand.hbm [shape: bf16[32,48], index: 1, kind: input, shape index: {}]
  %s2 = inlined_call_operand.hbm [shape: f32[2,8,16], index: 2, kind: output, shape index: {}]
  %s3 = sld [smem:[#allocation0]]
  $region26: #{tpu_custom_call.1} parent=0
    _
  %s5 = ssub.s32 1, %s3
  %s6 = scalar_select 0, %s5, %s3
  $region1: #{tpu_custom_call.1} parent=0
    #allocation2 [shape = 'u8[8192]{0}', space=vmem, size = 0x2000, scoped, tag = 'input window, operand 0, single buffered']
    #allocation3 [shape = 's32[1]{0}', space=sflag, size = 0x4, scoped, tag = 'scoped memory for tpu_custom_call.1']
    #allocation4 [shape = 's32[1]{0}', space=sflag, size = 0x4, scoped, tag = 'scoped memory for tpu_custom_call.1']
    #allocation5 [shape = 'u8[8192]{0}', space=vmem, size = 0x2000, scoped, tag = 'input window, operand 1, single buffered']
    #allocation6 [shape = 's32[1]{0}', space=sflag, size = 0x4, scoped, tag = 'scoped memory for tpu_custom_call.1']
    #allocation7 [shape = 'u8[8192]{0}', space=vmem, size = 0x2000, scoped, tag = 'output window, operand 0, single buffered']
    %7 = vsyncpa [#allocation3], 0
    %8 = vsyncpa [#allocation6], 0
    %9 = vsyncpa [#allocation4], 0
    // Predicated region
    $region2: #{tpu_custom_call.1} parent=1 // pred_check
      _
    $region3: #{tpu_custom_call.1} parent=1 // pred_check_branch
      %11 = sbr.rel (0) target = $region5
    $region4: #{tpu_custom_call.1} parent=1 // pred_region
      %s13 = ssub.s32 256, 256
      %14 = vsyncadd [#allocation3], %s13
      %s15 = sshll.u32 [#allocation2], 4
      %s16 = int_to_ptr.vmem [resolvable:$true] %s15
      %21 = dma.hbm_to_vmem [thread:$0]  %s0, 256, %s16, [#allocation3], 128, 128, 8
    $region5: #{tpu_custom_call.1} parent=1 // pred_fallthru
      _
    // Predicated region
    $region6: #{tpu_custom_call.1} parent=1 // pred_check
      _
    $region7: #{tpu_custom_call.1} parent=1 // pred_check_branch
      %23 = sbr.rel (0) target = $region9
    $region8: #{tpu_custom_call.1} parent=1 // pred_region
      %s25 = ssub.s32 256, 256
      %26 = vsyncadd [#allocation6], %s25
      %s27 = sshll.u32 [#allocation5], 4
      %s28 = int_to_ptr.vmem [resolvable:$true] %s27
      %33 = dma.hbm_to_vmem [thread:$0]  %s1, 256, %s28, [#allocation6], 64, 64, 4
    $region9: #{tpu_custom_call.1} parent=1 // pred_fallthru
      _
    // Predicated region
    $region10: #{tpu_custom_call.1} parent=1 // pred_check
      _
    $region11: #{tpu_custom_call.1} parent=1 // pred_check_branch
      %35 = sbr.rel (0) target = $region13
    $region12: #{tpu_custom_call.1} parent=1 // pred_region
      %36 = dma.done [#allocation3], 256
    $region13: #{tpu_custom_call.1} parent=1 // pred_fallthru
      _
    // Predicated region
    $region14: #{tpu_custom_call.1} parent=1 // pred_check
      _
    $region15: #{tpu_custom_call.1} parent=1 // pred_check_branch
      %38 = sbr.rel (0) target = $region17
    $region16: #{tpu_custom_call.1} parent=1 // pred_region
      %39 = dma.done [#allocation6], 256
    $region17: #{tpu_custom_call.1} parent=1 // pred_fallthru
      _
    %v41 = vld [vmem:[#allocation2] sm:$0xff]
    %v42 = vld [vmem:[#allocation2 + $0x8] sm:$0xff]
    %v43 = vpack.c.bf16 %v42, %v41
    %v44 = vld [vmem:[#allocation5] sm:$0xf]
    %v45 = vld [vmem:[#allocation5 + $0x4] sm:$0xf]
    %v46 = vld [vmem:[#allocation5 + $0x8] sm:$0xf]
    %v47 = vld [vmem:[#allocation5 + $0xc] sm:$0xf]
    %v52 = vunpack.c.l.b16 %v44
    %v53 = vunpack.c.l.b16 %v45
    %v54 = vunpack.c.l.b16 %v46
    %v55 = vunpack.c.l.b16 %v47
    %v56 = vpack.c.b16 %v53, %v52
    %v57 = vpack.c.b16 %v55, %v54
    %vm60 = vcmask 261120
    %v62 = vsel %vm60, %v43, 0
    %64 = vmatprep.subr.bf16.mxu0 0
    %65 = vmatpush1.bf16.msra.mxu0 %v56
    %66 = vmatprep.subr.bf16.mxu0 0
    %67 = vmatpush1.bf16.msra.mxu0 %v57
    %68 = vmatprep.subr.bf16.mxu0 0
    %69 = vmatpush1.bf16.msra.mxu0 0
    %70 = vmatprep.subr.bf16.mxu0 0
    %71 = vmatpush1.bf16.msra.mxu0 0
    %72 = vmatprep.subr.bf16.mxu0 0
    %73 = vmatpush1.bf16.msra.mxu0 0
    %74 = vmatprep.subr.bf16.mxu0 0
    %75 = vmatpush1.bf16.msra.mxu0 0
    %76 = vmatprep.subr.bf16.mxu0 0
    %77 = vmatpush1.bf16.msra.mxu0 0
    %78 = vmatprep.subr.bf16.mxu0 0
    %79 = vmatpush1.bf16.msra.mxu0 0
    %80 = vmatprep.subr.bf16.mxu0 0
    %81 = vmatpush1.bf16.msra.mxu0 0
    %82 = vmatprep.subr.bf16.mxu0 0
    %83 = vmatpush1.bf16.msra.mxu0 0
    %84 = vmatprep.subr.bf16.mxu0 0
    %85 = vmatpush1.bf16.msra.mxu0 0
    %86 = vmatprep.subr.bf16.mxu0 0
    %87 = vmatpush1.bf16.msra.mxu0 0
    %88 = vmatprep.subr.bf16.mxu0 0
    %89 = vmatpush1.bf16.msra.mxu0 0
    %90 = vmatprep.subr.bf16.mxu0 0
    %91 = vmatpush1.bf16.msra.mxu0 0
    %92 = vmatprep.subr.bf16.mxu0 0
    %93 = vmatpush1.bf16.msra.mxu0 0
    %94 = vmatprep.subr.bf16.mxu0 0
    %95 = vmatpush1.bf16.msra.mxu0 0
    %96 = vmatprep.mubr.bf16.mxu0 0
    %97 = vmatmul.mubr.bf16.gmra.mrb[0].mxu0 %v62
    %v98 = vpop.f32.mrb[0].mxu0
    %v99 = vadd.f32 0.0, %v98
    %v100 = vpop.f32.mrb[0].mxu0
    %v101 = vpop.f32.mrb[0].mxu0
    %v102 = vadd.f32 0.0, %v101
    %v103 = vpop.f32.mrb[0].mxu0
    %104 = vdwg.mxu0
    %v105 = vpack.c.bf16 %v99, %v99
    %v106 = vpack.c.bf16 %v102, %v102
    %108 = vrot.lane.b32.xlu0 %v105, 112
    %v109 = vpop.permute.xlu0 %108
    %vm110 = vcmask 130048
    %v112 = vsel %vm110, %v105, 0
    %v115 = vsel %vm110, %v109, 0
    %117 = vmatprep.subr.bf16.mxu0 0
    %118 = vmatpush1.bf16.xpose.msra.mxu0 %v115
    %119 = vmatprep.subr.bf16.mxu0 0
    %120 = vmatpush1.bf16.xpose.msra.mxu0 0
    %121 = vmatprep.subr.bf16.mxu0 0
    %122 = vmatpush1.bf16.xpose.msra.mxu0 0
    %123 = vmatprep.subr.bf16.mxu0 0
    %124 = vmatpush1.bf16.xpose.msra.mxu0 0
    %125 = vmatprep.subr.bf16.mxu0 0
    %126 = vmatpush1.bf16.xpose.msra.mxu0 0
    %127 = vmatprep.subr.bf16.mxu0 0
    %128 = vmatpush1.bf16.xpose.msra.mxu0 0
    %129 = vmatprep.subr.bf16.mxu0 0
    %130 = vmatpush1.bf16.xpose.msra.mxu0 0
    %131 = vmatprep.subr.bf16.mxu0 0
    %132 = vmatpush1.bf16.xpose.msra.mxu0 0
    %133 = vmatprep.subr.bf16.mxu0 0
    %134 = vmatpush1.bf16.xpose.msra.mxu0 0
    %135 = vmatprep.subr.bf16.mxu0 0
    %136 = vmatpush1.bf16.xpose.msra.mxu0 0
    %137 = vmatprep.subr.bf16.mxu0 0
    %138 = vmatpush1.bf16.xpose.msra.mxu0 0
    %139 = vmatprep.subr.bf16.mxu0 0
    %140 = vmatpush1.bf16.xpose.msra.mxu0 0
    %141 = vmatprep.subr.bf16.mxu0 0
    %142 = vmatpush1.bf16.xpose.msra.mxu0 0
    %143 = vmatprep.subr.bf16.mxu0 0
    %144 = vmatpush1.bf16.xpose.msra.mxu0 0
    %145 = vmatprep.subr.bf16.mxu0 0
    %146 = vmatpush1.bf16.xpose.msra.mxu0 0
    %147 = vmatprep.subr.bf16.mxu0 0
    %148 = vmatpush1.bf16.xpose.msra.mxu0 0
    %149 = vmatprep.mubr.bf16.mxu0 0
    %150 = vmatmul.mubr.bf16.gmra.mrb[0].mxu0 %v112
    %v151 = vpop.f32.mrb[0].mxu0
    %v152 = vadd.f32 0.0, %v151
    %v153 = vpop.f32.mrb[0].mxu0
    %v154 = vpop.f32.mrb[0].mxu0
    %v155 = vpop.f32.mrb[0].mxu0
    %156 = vdwg.mxu0
    %158 = vrot.lane.b32.xlu0 %v106, 112
    %v159 = vpop.permute.xlu0 %158
    %v161 = vsel %vm110, %v106, 0
    %v164 = vsel %vm110, %v159, 0
    %166 = vmatprep.subr.bf16.mxu0 0
    %167 = vmatpush1.bf16.xpose.msra.mxu0 %v164
    %168 = vmatprep.subr.bf16.mxu0 0
    %169 = vmatpush1.bf16.xpose.msra.mxu0 0
    %170 = vmatprep.subr.bf16.mxu0 0
    %171 = vmatpush1.bf16.xpose.msra.mxu0 0
    %172 = vmatprep.subr.bf16.mxu0 0
    %173 = vmatpush1.bf16.xpose.msra.mxu0 0
    %174 = vmatprep.subr.bf16.mxu0 0
    %175 = vmatpush1.bf16.xpose.msra.mxu0 0
    %176 = vmatprep.subr.bf16.mxu0 0
    %177 = vmatpush1.bf16.xpose.msra.mxu0 0
    %178 = vmatprep.subr.bf16.mxu0 0
    %179 = vmatpush1.bf16.xpose.msra.mxu0 0
    %180 = vmatprep.subr.bf16.mxu0 0
    %181 = vmatpush1.bf16.xpose.msra.mxu0 0
    %182 = vmatprep.subr.bf16.mxu0 0
    %183 = vmatpush1.bf16.xpose.msra.mxu0 0
    %184 = vmatprep.subr.bf16.mxu0 0
    %185 = vmatpush1.bf16.xpose.msra.mxu0 0
    %186 = vmatprep.subr.bf16.mxu0 0
    %187 = vmatpush1.bf16.xpose.msra.mxu0 0
    %188 = vmatprep.subr.bf16.mxu0 0
    %189 = vmatpush1.bf16.xpose.msra.mxu0 0
    %190 = vmatprep.subr.bf16.mxu0 0
    %191 = vmatpush1.bf16.xpose.msra.mxu0 0
    %192 = vmatprep.subr.bf16.mxu0 0
    %193 = vmatpush1.bf16.xpose.msra.mxu0 0
    %194 = vmatprep.subr.bf16.mxu0 0
    %195 = vmatpush1.bf16.xpose.msra.mxu0 0
    %196 = vmatprep.subr.bf16.mxu0 0
    %197 = vmatpush1.bf16.xpose.msra.mxu0 0
    %198 = vmatprep.mubr.bf16.mxu0 0
    %199 = vmatmul.mubr.bf16.gmra.mrb[0].mxu0 %v161
    %v200 = vpop.f32.mrb[0].mxu0
    %v201 = vadd.f32 0.0, %v200
    %v202 = vpop.f32.mrb[0].mxu0
    %v203 = vpop.f32.mrb[0].mxu0
    %v204 = vpop.f32.mrb[0].mxu0
    %205 = vdwg.mxu0
    %v206 = vlaneseq
    %v207 = vshrl.u32 %v206, 7
    %v208 = vlaneseq
    %v209 = vand.u32 %v208, 127
    %vm210 = vcmp.le.s32.totalorder %v209, %v207
    %v211 = vsel %vm210, 1, 0
    %vm212 = vcmp.eq.s32.totalorder %v211, 1
    %v213 = vsel %vm212, %v152, -1e+30
    %v214 = vsel %vm212, %v201, -1e+30
    %vm215 = vcmask 64512
    %v216 = vsel %vm215, %v213, -inf
    %217 = vmax.xlane.f32.xlu0 %v216
    %v218 = vpop.xlane.xlu0 %217
    %v219 = vsel %vm215, %v214, -inf
    %220 = vmax.xlane.f32.xlu0 %v219
    %v221 = vpop.xlane.xlu0 %220
    %v222 = vsub.f32 %v213, %v218
    %v223 = vsub.f32 %v214, %v221
    %v224 = vmul.f32 %v222, 1.442695
    %v225 = vpow.pop %v224
    %v226 = vmul.f32 %v223, 1.442695
    %v227 = vpow.pop %v226
    %v228 = vsel %vm215, %v225, 0.0
    %229 = vadd.xlane.f32.xlu0 %v228
    %v230 = vpop.xlane.xlu0 %229
    %v231 = vsel %vm215, %v227, 0.0
    %232 = vadd.xlane.f32.xlu0 %v231
    %v233 = vpop.xlane.xlu0 %232
    %v234 = vpack.c.bf16 %v225, %v225
    %v235 = vpack.c.bf16 %v227, %v227
    %236 = vrot.lane.b32.xlu0 %v105, 96
    %v237 = vpop.permute.xlu0 %236
    %v239 = vsel %vm215, %v234, 0
    %vm241 = vcmask 1043456
    %v243 = vsel %vm241, %v237, 0
    %245 = vmatprep.subr.bf16.mxu0 0
    %246 = vmatpush1.bf16.msra.mxu0 %v243
    %247 = vmatprep.subr.bf16.mxu0 0
    %248 = vmatpush1.bf16.msra.mxu0 0
    %249 = vmatprep.subr.bf16.mxu0 0
    %250 = vmatpush1.bf16.msra.mxu0 0
    %251 = vmatprep.subr.bf16.mxu0 0
    %252 = vmatpush1.bf16.msra.mxu0 0
    %253 = vmatprep.subr.bf16.mxu0 0
    %254 = vmatpush1.bf16.msra.mxu0 0
    %255 = vmatprep.subr.bf16.mxu0 0
    %256 = vmatpush1.bf16.msra.mxu0 0
    %257 = vmatprep.subr.bf16.mxu0 0
    %258 = vmatpush1.bf16.msra.mxu0 0
    %259 = vmatprep.subr.bf16.mxu0 0
    %260 = vmatpush1.bf16.msra.mxu0 0
    %261 = vmatprep.subr.bf16.mxu0 0
    %262 = vmatpush1.bf16.msra.mxu0 0
    %263 = vmatprep.subr.bf16.mxu0 0
    %264 = vmatpush1.bf16.msra.mxu0 0
    %265 = vmatprep.subr.bf16.mxu0 0
    %266 = vmatpush1.bf16.msra.mxu0 0
    %267 = vmatprep.subr.bf16.mxu0 0
    %268 = vmatpush1.bf16.msra.mxu0 0
    %269 = vmatprep.subr.bf16.mxu0 0
    %270 = vmatpush1.bf16.msra.mxu0 0
    %271 = vmatprep.subr.bf16.mxu0 0
    %272 = vmatpush1.bf16.msra.mxu0 0
    %273 = vmatprep.subr.bf16.mxu0 0
    %274 = vmatpush1.bf16.msra.mxu0 0
    %275 = vmatprep.subr.bf16.mxu0 0
    %276 = vmatpush1.bf16.msra.mxu0 0
    %277 = vmatprep.mubr.bf16.mxu0 0
    %278 = vmatmul.mubr.bf16.gmra.mrb[0].mxu0 %v239
    %v279 = vpop.f32.mrb[0].mxu0
    %v280 = vadd.f32 0.0, %v279
    %v281 = vpop.f32.mrb[0].mxu0
    %v282 = vpop.f32.mrb[0].mxu0
    %v283 = vpop.f32.mrb[0].mxu0
    %284 = vdwg.mxu0
    %285 = vrot.lane.b32.xlu0 %v106, 96
    %v286 = vpop.permute.xlu0 %285
    %v288 = vsel %vm215, %v235, 0
    %v291 = vsel %vm241, %v286, 0
    %293 = vmatprep.subr.bf16.mxu0 0
    %294 = vmatpush1.bf16.msra.mxu0 %v291
    %295 = vmatprep.subr.bf16.mxu0 0
    %296 = vmatpush1.bf16.msra.mxu0 0
    %297 = vmatprep.subr.bf16.mxu0 0
    %298 = vmatpush1.bf16.msra.mxu0 0
    %299 = vmatprep.subr.bf16.mxu0 0
    %300 = vmatpush1.bf16.msra.mxu0 0
    %301 = vmatprep.subr.bf16.mxu0 0
    %302 = vmatpush1.bf16.msra.mxu0 0
    %303 = vmatprep.subr.bf16.mxu0 0
    %304 = vmatpush1.bf16.msra.mxu0 0
    %305 = vmatprep.subr.bf16.mxu0 0
    %306 = vmatpush1.bf16.msra.mxu0 0
    %307 = vmatprep.subr.bf16.mxu0 0
    %308 = vmatpush1.bf16.msra.mxu0 0
    %309 = vmatprep.subr.bf16.mxu0 0
    %310 = vmatpush1.bf16.msra.mxu0 0
    %311 = vmatprep.subr.bf16.mxu0 0
    %312 = vmatpush1.bf16.msra.mxu0 0
    %313 = vmatprep.subr.bf16.mxu0 0
    %314 = vmatpush1.bf16.msra.mxu0 0
    %315 = vmatprep.subr.bf16.mxu0 0
    %316 = vmatpush1.bf16.msra.mxu0 0
    %317 = vmatprep.subr.bf16.mxu0 0
    %318 = vmatpush1.bf16.msra.mxu0 0
    %319 = vmatprep.subr.bf16.mxu0 0
    %320 = vmatpush1.bf16.msra.mxu0 0
    %321 = vmatprep.subr.bf16.mxu0 0
    %322 = vmatpush1.bf16.msra.mxu0 0
    %323 = vmatprep.subr.bf16.mxu0 0
    %324 = vmatpush1.bf16.msra.mxu0 0
    %325 = vmatprep.mubr.bf16.mxu0 0
    %326 = vmatmul.mubr.bf16.gmra.mrb[0].mxu0 %v288
    %v327 = vpop.f32.mrb[0].mxu0
    %v328 = vadd.f32 0.0, %v327
    %v329 = vpop.f32.mrb[0].mxu0
    %v330 = vpop.f32.mrb[0].mxu0
    %v331 = vpop.f32.mrb[0].mxu0
    %332 = vdwg.mxu0
    %v333 = vrcp.pop %v230
    %v334 = vmul.f32 %v280, %v333
    %v335 = vrcp.pop %v233
    %v336 = vmul.f32 %v328, %v335
    %337 = vst.msk [vmem:[#allocation7] sm:$0xff] %vm110, %v334
    %338 = vst.msk [vmem:[#allocation7 + $0x8] sm:$0xff] %vm110, %v336
    // Predicated region
    $region18: #{tpu_custom_call.1} parent=1 // pred_check
      _
    $region19: #{tpu_custom_call.1} parent=1 // pred_check_branch
      %340 = sbr.rel (0) target = $region21
    $region20: #{tpu_custom_call.1} parent=1 // pred_region
      %s342 = ssub.s32 256, 256
      %343 = vsyncadd [#allocation4], %s342
      %s344 = sshll.u32 [#allocation7], 4
      %s345 = int_to_ptr.vmem [resolvable:$true] %s344
      %350 = dma.vmem_to_hbm [thread:$0]  %s345, 256, %s2, [#allocation4], 128, 128, 8
    $region21: #{tpu_custom_call.1} parent=1 // pred_fallthru
      _
    // Predicated region
    $region22: #{tpu_custom_call.1} parent=1 // pred_check
      _
    $region23: #{tpu_custom_call.1} parent=1 // pred_check_branch
      %352 = sbr.rel (0) target = $region25
    $region24: #{tpu_custom_call.1} parent=1 // pred_region
      %353 = dma.done [#allocation4], 256
    $region25: #{tpu_custom_call.1} parent=1 // pred_fallthru
      _
    %354 = vsyncpa [#allocation3], 1
    %355 = vsyncpa [#allocation6], 1
    %356 = vsyncpa [#allocation4], 1

</llo_original>
